<compile_context>
chip_gen: v6e
topology: v6e:2x2x1
jax: 0.10.0
libtpu: 0.0.40
codegen_flags: <defaults>
</compile_context>

<pallas_src>
import functools

import jax
import jax.numpy as jnp
from jax.experimental import pallas as pl
from jax.experimental.pallas import tpu as pltpu


def _round_up(n, m):
    return ((n + m - 1) // m) * m


def _fpe_kernel(inv_freq_ref, o_ref, *, tile_t):
    # inv_freq_ref: (1, half) inverse frequencies (grid-invariant).
    # o_ref:        (1, tile_t, dim) output block at sequence offset
    #               pl.program_id(0) * tile_t.
    row0 = pl.program_id(0) * tile_t

    # Absolute positions of this block's rows, as a (tile_t, 1) f32 column.
    pos = jax.lax.broadcasted_iota(jnp.int32, (tile_t, 1), 0) + row0
    pos = pos.astype(jnp.float32)

    # Half-width angle grid: (tile_t, half) = pos * inv_freq (lane broadcast).
    angle = pos * inv_freq_ref[...]

    # One sin and one cos over the HALF-width tile (total = dim transcendentals
    # per row, vs 2*dim previously), reassembled via a lane concatenate.
    emb = jnp.concatenate([jnp.sin(angle), jnp.cos(angle)], axis=-1)

    o_ref[0] = emb.astype(o_ref.dtype)  # == `.to(x)` dtype cast


def _pick_seq_tile(T, dim, dsize):
    """Sequence-tile rows: byte-budgeted, sublane-rounded, VMEM-safe, >=2 steps."""
    sub = {4: 8, 2: 16, 1: 32}.get(dsize, 8)          # sublane multiple for dtype
    padded_full = _round_up(T, sub)

    budget = 1 << 20                                   # ~1 MiB per output block
    tile = budget // max(1, dim * dsize)
    tile = min(max(tile, 256), 2048)                   # keep grid-step count low
    # Per-buffer VMEM safety cap (v7x: 64 MiB physical / 32 MiB default scoped).
    vmem_rows = (8 << 20) // max(1, dim * dsize)
    tile = min(tile, max(sub, vmem_rows))
    tile = max(sub, (tile // sub) * sub)
    tile = min(tile, padded_full)

    # Guarantee >= 2 grid steps when there is enough work so the "parallel"
    # axis can shard across both v7x TensorCores (no-op cost on v5e/v6e).
    if padded_full >= 2 * sub and pl.cdiv(padded_full, tile) < 2:
        tile = _round_up(pl.cdiv(padded_full, 2), sub)

    return tile


def fixed_positional_embedding_pallas(x, *, dim, max_seq_len):
    """Equivalent of FixedPositionalEmbedding(dim, max_seq_len)(x).

    x: (B, T, ...) -- only x.shape[1] (sequence length) and x.dtype are used.
    Returns the (1, T, dim) positional embedding cast to x.dtype.
    """
    assert dim % 2 == 0, "FixedPositionalEmbedding kernel requires even dim"
    T = x.shape[1]
    assert T <= max_seq_len, "sequence length exceeds max_seq_len"
    half = dim // 2
    dsize = jnp.dtype(x.dtype).itemsize

    # Same host-side math as the PyTorch __init__ (only inv_freq is needed; the
    # sinusoid table itself is generated on-chip).
    inv_freq = 1.0 / (10000.0 ** (jnp.arange(0, dim, 2, dtype=jnp.float32) / dim))
    inv_freq = inv_freq.reshape(1, half)

    tile_t = _pick_seq_tile(T, dim, dsize)
    grid_n = pl.cdiv(T, tile_t)
    padded_T = grid_n * tile_t

    kernel = functools.partial(_fpe_kernel, tile_t=tile_t)

    cost = pl.CostEstimate(
        flops=10 * padded_T * dim,          # iota/mul/cast/concat bookkeeping
        transcendentals=padded_T * dim,     # one sin-or-cos per output element
        bytes_accessed=padded_T * dim * dsize + half * 4,
    )

    out = pl.pallas_call(
        kernel,
        out_shape=jax.ShapeDtypeStruct((1, padded_T, dim), x.dtype),
        grid_spec=pltpu.PrefetchScalarGridSpec(
            num_scalar_prefetch=0,
            grid=(grid_n,),
            in_specs=[
                pl.BlockSpec((1, half), lambda i: (0, 0)),        # inv_freq (invariant)
            ],
            out_specs=pl.BlockSpec((1, tile_t, dim), lambda i: (0, i, 0)),
        ),
        compiler_params=pltpu.CompilerParams(
            dimension_semantics=("parallel",)),
        cost_estimate=cost,
    )(inv_freq)

    if padded_T != T:
        out = out[:, :T, :]
    return out


def fixed_positional_embedding_ref(x, *, dim, max_seq_len):
    """Pure-JAX reference mirroring the PyTorch module."""
    inv_freq = 1.0 / (10000.0 ** (jnp.arange(0, dim, 2, dtype=jnp.float32) / dim))
    position = jnp.arange(0, max_seq_len, dtype=jnp.float32)
    sinusoid_inp = jnp.einsum('i,j->ij', position, inv_freq)
    emb = jnp.concatenate([jnp.sin(sinusoid_inp), jnp.cos(sinusoid_inp)], axis=-1)
    return emb[None, :x.shape[1], :].astype(x.dtype)


if __name__ == "__main__":
    key = jax.random.PRNGKey(0)
    B, T, dim, max_seq_len = 2, 16, 32, 64

    x = jax.random.normal(key, (B, T, dim), dtype=jnp.float32)

    out = fixed_positional_embedding_pallas(x, dim=dim, max_seq_len=max_seq_len)
    out = jax.block_until_ready(out)

    ref = fixed_positional_embedding_ref(x, dim=dim, max_seq_len=max_seq_len)
    assert out.shape == (1, T, dim)
    assert out.dtype == x.dtype
    assert jnp.allclose(out, ref, atol=1e-5, rtol=1e-5), "f32 mismatch vs reference"

    # Exercise the `.to(x)` dtype-follow path with bf16 activations.
    x_bf16 = x.astype(jnp.bfloat16)
    out_bf16 = jax.block_until_ready(
        fixed_positional_embedding_pallas(x_bf16, dim=dim, max_seq_len=max_seq_len))
    ref_bf16 = fixed_positional_embedding_ref(x_bf16, dim=dim, max_seq_len=max_seq_len)
    assert out_bf16.shape == (1, T, dim)
    assert out_bf16.dtype == jnp.bfloat16
    assert jnp.allclose(out_bf16.astype(jnp.float32),
                        ref_bf16.astype(jnp.float32), atol=1e-2, rtol=1e-2), \
        "bf16 mismatch vs reference"

    # Exercise an irregular T (not a multiple of the sublane/tile) via cdiv+pad.
    T2 = 13
    x2 = jax.random.normal(key, (B, T2, dim), dtype=jnp.float32)
    out2 = jax.block_until_ready(
        fixed_positional_embedding_pallas(x2, dim=dim, max_seq_len=max_seq_len))
    ref2 = fixed_positional_embedding_ref(x2, dim=dim, max_seq_len=max_seq_len)
    assert out2.shape == (1, T2, dim)
    assert jnp.allclose(out2, ref2, atol=1e-5, rtol=1e-5), "irregular-T mismatch"

    print("KERNEL_OK")
</pallas_src>

<mosaic_0001>
module attributes {stable_mosaic.version = 11 : i64} {
  func.func @_fpe_kernel(%arg0: i32, %arg1: memref<1x16xf32, #tpu.memory_space<vmem>>, %arg2: memref<1x8x32xf32, #tpu.memory_space<vmem>>) attributes {dimension_semantics = [#tpu.dimension_semantics<parallel>], iteration_bounds = array<i64: 2>, scalar_prefetch = 0 : i64, scratch_operands = 0 : i64, tpu.core_type = #tpu.core_type<tc>, window_params = [{pipeline_mode = #tpu.pipeline_mode<synchronous>, transform_indices = @transform_0, window_bounds = array<i64: 1, 16>}, {transform_indices = @transform_1, window_bounds = array<i64: 1, 8, 32>}]} {
    %c8_i32 = arith.constant 8 : i32
    %0 = arith.muli %arg0, %c8_i32 : i32
    %1 = tpu.iota {dimensions = array<i32: 0>} : vector<8x1xi32>
    %2 = vector.broadcast %0 : i32 to vector<8x1xi32>
    %3 = arith.addi %1, %2 : vector<8x1xi32>
    %4 = arith.sitofp %3 : vector<8x1xi32> to vector<8x1xf32>
    %c0 = arith.constant 0 : index
    %c0_0 = arith.constant 0 : index
    %5 = vector.load %arg1[%c0, %c0_0] : memref<1x16xf32, #tpu.memory_space<vmem>>, vector<1x16xf32>
    %6 = vector.broadcast %4 : vector<8x1xf32> to vector<8x16xf32>
    %7 = vector.broadcast %5 : vector<1x16xf32> to vector<8x16xf32>
    %8 = arith.mulf %6, %7 : vector<8x16xf32>
    %9 = math.sin %8 : vector<8x16xf32>
    %10 = math.cos %8 : vector<8x16xf32>
    %11 = tpu.concatenate %9, %10 in 1 : vector<8x16xf32>, vector<8x16xf32> -> vector<8x32xf32>
    %c0_1 = arith.constant 0 : index
    %c0_2 = arith.constant 0 : index
    %c0_3 = arith.constant 0 : index
    %12 = vector.load %arg2[%c0_1, %c0_2, %c0_3] : memref<1x8x32xf32, #tpu.memory_space<vmem>>, vector<1x8x32xf32>
    %13 = vector.shape_cast %12 : vector<1x8x32xf32> to vector<8x32xf32>
    %14 = vector.shape_cast %11 : vector<8x32xf32> to vector<1x8x32xf32>
    tpu.vector_store %arg2[%c0_1, %c0_2, %c0_3], %14 {strides = array<i32>} : memref<1x8x32xf32, #tpu.memory_space<vmem>>, vector<1x8x32xf32>,
    return
  }
  func.func @transform_0(%arg0: i32) -> (i32, i32) {
    %c0_i32 = arith.constant 0 : i32
    %c0_i32_0 = arith.constant 0 : i32
    %c0_i32_1 = arith.constant 0 : i32
    return %c0_i32, %c0_i32_0 : i32, i32
  }
  func.func @transform_1(%arg0: i32) -> (i32, i32, i32) {
    %c0_i32 = arith.constant 0 : i32
    %c0_i32_0 = arith.constant 0 : i32
    %c0_i32_1 = arith.constant 0 : i32
    return %c0_i32, %arg0, %c0_i32_0 : i32, i32, i32
  }
}

</mosaic_0001>

<llo_original>
// kernel: tpu_custom_call.1
$region0: #{tpu_custom_call.1}
  #allocation0 [shape = 'u32[]', space=smem, size = 0x4, offset = 0x4, fixed_abs, tag = 'smem constant byte address 0x4 - core index']
  #allocation1 [shape = 'u32[144,128]{1,0:T(1,128)}', space=vmem, size = 0x12000, scoped, tag = 'internal scratch']
  %s0 = inlined_call_operand.hbm [shape: f32[1,16], index: 0, kind: input, shape index: {}]
  %s1 = inlined_call_operand.hbm [shape: f32[1,16,32], index: 1, kind: output, shape index: {}]
  %s2 = sld [smem:[#allocation0]]
  $region41: #{tpu_custom_call.1} parent=0
    _
  %s4 = ssub.s32 1, %s2
  %s5 = scalar_select 0, %s4, %s2
  $region1: #{tpu_custom_call.1} parent=0
    #allocation2 [shape = 'u8[512]{0}', space=vmem, size = 0x400, scoped, tag = 'input window, operand 0, single buffered']
    #allocation3 [shape = 's32[2]{0}', space=sflag, size = 0x8, scoped, tag = 'scoped memory for tpu_custom_call.1']
    #allocation4 [shape = 's32[2]{0}', space=sflag, size = 0x8, scoped, tag = 'scoped memory for tpu_custom_call.1']
    #allocation5 [shape = 'u8[8192]{0}', space=vmem, size = 0x2000, scoped, tag = 'output window, operand 0']
    %6 = vsyncpa [#allocation3], 0
    %7 = vsyncpa [#allocation4], 0
    %s8 = scalar_lea.sflag [#allocation4], 1
    %9 = vsyncpa %s8, 0
    loop: start=0, step=1, limit=4
    $region2: #{tpu_custom_call.1} parent=1 // loop_pre_header
      _
    $region3: #{tpu_custom_call.1} parent=1 // loop_header
      %s11 = sphi 0, %s15
      %p12 = scmp.ge.s32.totalorder %s11, 4
      %s19 = sphi 0, %s19
      %s21 = sphi 0, %s19
      %s22 = sphi 0, %s21
      %s36 = sphi 0, %s22
      %s42 = sphi 0, %s44
      %s45 = sphi 0, %s42
      %s46 = sphi 0, %s45
      %s62 = sphi 0, %s46
    $region4: #{tpu_custom_call.1} parent=1 // loop_header_branch
      %14 = sbr.rel (%p12) target = $region8
    $region5: #{tpu_custom_call.1} parent=1 // loop_body
      %s16 = ssub.s32 %s11, 1
      %s17 = ssub.s32 %s11, 2
      %s18 = sadd.s32 %s11, 1
      %s20 = sadd.s32 %s19, 1
      %p23 = scmp.eq.s32.totalorder %s11, 1
      %p24 = scmp.ne.s32.totalorder %s19, %s21
      %p25 = scmp.eq.s32.totalorder %s11, 0
      %p26 = por %p24, %p25
      %p27 = scmp.ne.s32.totalorder %s19, %s21
      %p28 = scmp.eq.s32.totalorder %s16, 1
      %p29 = por %p27, %p28
      %p30 = scmp.ne.s32.totalorder %s21, %s22
      %p31 = scmp.eq.s32.totalorder %s16, 0
      %p32 = por %p30, %p31
      %p33 = scmp.ne.s32.totalorder %s21, %s22
      %p34 = scmp.eq.s32.totalorder %s17, 1
      %p35 = por %p33, %p34
      %p37 = scmp.ne.s32.totalorder %s22, %s36
      %p38 = scmp.eq.s32.totalorder %s17, 0
      %p39 = por %p37, %p38
      %s40 = ssub.s32 %s11, %s18
      %p41 = scmp.eq.s32.totalorder %s40, 0
      %s43 = sadd.s32 %s42, 1
      %s44 = scalar_select %p41, %s42, %s43
      %p47 = pneg %p41
      %p48 = scmp.eq.s32.totalorder %s11, 1
      %p49 = por %p47, %p48
      %p50 = scmp.ne.s32.totalorder %s42, %s45
      %p51 = scmp.eq.s32.totalorder %s11, 0
      %p52 = por %p50, %p51
      %p53 = scmp.ne.s32.totalorder %s42, %s45
      %p54 = scmp.eq.s32.totalorder %s16, 1
      %p55 = por %p53, %p54
      %p56 = scmp.ne.s32.totalorder %s45, %s46
      %p57 = scmp.eq.s32.totalorder %s16, 0
      %p58 = por %p56, %p57
      %p59 = scmp.ne.s32.totalorder %s45, %s46
      %p60 = scmp.eq.s32.totalorder %s17, 1
      %p61 = por %p59, %p60
      %p63 = scmp.ne.s32.totalorder %s46, %s62
      %p64 = scmp.eq.s32.totalorder %s17, 0
      %p65 = por %p63, %p64
      %p66 = scmp.le.s32.totalorder 1, %s11
      %p67 = scmp.lt.s32.totalorder %s11, 3
      %p68 = pnand %p66, %p67
      %p69 = pneg %p68
      // Predicated region
      $region9: #{tpu_custom_call.1} parent=5 // pred_check
        _
      $region10: #{tpu_custom_call.1} parent=5 // pred_check_branch
        %71 = sbr.rel (%p68) target = $region12
      $region11: #{tpu_custom_call.1} parent=5 // pred_region
        %s72 = ssub.s32 %s11, 1
        // Predicated region
        $region13: #{tpu_custom_call.1} parent=11 // pred_check
          %p73 = pneg %p32
        $region14: #{tpu_custom_call.1} parent=11 // pred_check_branch
          %75 = sbr.rel (%p73) target = $region16
        $region15: #{tpu_custom_call.1} parent=11 // pred_region
          %s77 = ssub.s32 16, 16
          %78 = vsyncadd [#allocation3], %s77
          %s80 = sshll.u32 [#allocation2], 4
          %s81 = int_to_ptr.vmem [resolvable:$true] %s80
          %83 = dma.hbm_to_vmem [thread:$0]  %s0, 16, %s81, [#allocation3]
        $region16: #{tpu_custom_call.1} parent=11 // pred_fallthru
          _
      $region12: #{tpu_custom_call.1} parent=5 // pred_fallthru
        _
      %p84 = scmp.lt.s32.totalorder %s11, 2
      // Predicated region
      $region17: #{tpu_custom_call.1} parent=5 // pred_check
        %p85 = pneg %p84
      $region18: #{tpu_custom_call.1} parent=5 // pred_check_branch
        %87 = sbr.rel (%p85) target = $region20
      $region19: #{tpu_custom_call.1} parent=5 // pred_region
        _
      $region20: #{tpu_custom_call.1} parent=5 // pred_fallthru
        _
      %p88 = scmp.le.s32.totalorder 1, %s11
      %p89 = scmp.lt.s32.totalorder %s11, 3
      %p90 = pnand %p88, %p89
      %p91 = pneg %p90
      // Predicated region
      $region21: #{tpu_custom_call.1} parent=5 // pred_check
        _
      $region22: #{tpu_custom_call.1} parent=5 // pred_check_branch
        %93 = sbr.rel (%p90) target = $region24
      $region23: #{tpu_custom_call.1} parent=5 // pred_region
        %s94 = ssub.s32 %s11, 1
        // Predicated region
        $region25: #{tpu_custom_call.1} parent=23 // pred_check
          %p95 = pneg %p32
        $region26: #{tpu_custom_call.1} parent=23 // pred_check_branch
          %97 = sbr.rel (%p95) target = $region28
        $region27: #{tpu_custom_call.1} parent=23 // pred_region
          %98 = dma.done [#allocation3], 16
        $region28: #{tpu_custom_call.1} parent=23 // pred_fallthru
          _
        %p99 = pneg %p32
        %p100 = pneg %p29
        %p101 = pneg %p58
        %p102 = pneg %p55
        %s103 = sand.u32 %s45, 1
        %s104 = scalar_lea.sflag [#allocation4], %s103
        %s105 = sand.u32 %s45, 1
        %s106 = smul.addr %s105, 8
        %s107 = scalar_lea.vmem [#allocation5], %s106
        %s108 = smul.u32 %s16, 8
        %v109 = vlaneseq
        %v110 = vshrl.u32 %v109, 7
        %v111 = vstv %s108
        %v112 = vadd.s32 %v110, %v111
        %v113 = vcvt.s32.f32 %v112
        %v114 = vld [vmem:[#allocation2] sm:$0x1]
        %v116 = vlaneseq
        %v117 = vshrl.u32 %v116, 7
        %v118 = vsub.s32 0, %v117
        %v119 = vrot.slane %v114, %v118
        %v121 = vmul.f32 %v113, %v119
        %v122 = vand.u32 2147483647, %v121
        %vm123 = vcmp.le.f32.partialorder %v122, 0.7853982
        %vm124 = vcmp.lt.s32.totalorder %v121, 0
        %v125 = vand.u32 %v121, 2139095040
        %v126 = vshrl.u32 %v125, 23
        %v127 = vsub.s32 %v126, 127
        %v128 = vand.u32 2147483647, %v121
        %v129 = vand.u32 %v128, 8388607
        %v130 = vor.u32 %v129, 8388608
        %v131 = vsub.s32 0, %v130
        %v132 = vadd.s32 %v127, 1
        %vm133 = vcmp.gt.s32.totalorder %v132, 0
        %v134 = vsel %vm133, %v132, 0
        %v135 = vshrl.u32 %v134, 5
        %v136 = vand.u32 %v134, 31
        %v137 = vsub.s32 32, %v136
        %v138 = vshrl.u32 683565275, %v137
        %v139 = vshll.u32 683565275, %v136
        %v140 = vshrl.u32 2475754826, %v137
        %v141 = vor.u32 %v139, %v140
        %v142 = vshll.u32 2475754826, %v136
        %v143 = vshrl.u32 2131351028, %v137
        %v144 = vor.u32 %v142, %v143
        %v145 = vshll.u32 2131351028, %v136
        %v146 = vshrl.u32 2102212464, %v137
        %v147 = vor.u32 %v145, %v146
        %v148 = vshll.u32 2102212464, %v136
        %v149 = vshrl.u32 920167782, %v137
        %v150 = vor.u32 %v148, %v149
        %v151 = vshll.u32 920167782, %v136
        %v152 = vshrl.u32 1326507024, %v137
        %v153 = vor.u32 %v151, %v152
        %vm154 = vcmp.lt.s32.totalorder %v135, 1
        %vm155 = vcmp.lt.s32.totalorder %v135, 2
        %vm156 = vcmp.lt.s32.totalorder %v135, 3
        %vm157 = vcmp.lt.s32.totalorder %v135, 4
        %v158 = vsel %vm154, %v138, %v141
        %v159 = vsel %vm157, %v147, 2102212464
        %v160 = vsel %vm156, %v144, %v159
        %v161 = vsel %vm155, %v158, %v160
        %v162 = vsel %vm154, %v141, %v144
        %v163 = vsel %vm157, %v150, 920167782
        %v164 = vsel %vm156, %v147, %v163
        %v165 = vsel %vm155, %v162, %v164
        %v166 = vsel %vm154, %v144, %v147
        %v167 = vsel %vm157, %v153, 1326507024
        %v168 = vsel %vm156, %v150, %v167
        %v169 = vsel %vm155, %v166, %v168
        %v170 = vshll.u32 %v130, 8
        %v171 = vmul.u32.u64.compose %v170, %v169
        %v172 = vextract.low.u32 %v171
        %v173 = vextract.high.u32 %v171
        %v174 = vmul.u32.u64.compose %v170, %v165
        %v175 = vextract.low.u32 %v174
        %v176 = vextract.high.u32 %v174
        %v177 = vmul.u32 %v170, %v161
        %v178 = vadd.s32 %v173, %v175
        %vm179 = vc.u32 %v173, %v175
        %v180 = vadd.s32 %v176, 1
        %v181 = vsel %vm179, %v180, %v176
        %v182 = vadd.s32 %v177, %v181
        %v183 = vadd.s32 %v182, 536870912
        %v184 = vshrl.u32 %v183, 30
        %v185 = vshll.u32 %v184, 30
        %v186 = vsub.s32 %v182, %v185
        %vm187 = vcmp.lt.s32.totalorder %v186, 0
        %v188 = vsub.s32 0, %v186
        %v189 = vsel %vm187, %v188, %v186
        %v190 = vclz %v189
        %v191 = vsub.s32 %v190, 2
        %vm192 = vcmp.gt.s32.totalorder 0, %v191
        %v193 = vsel %vm192, 0, %v191
        %v194 = vsub.s32 32, %v193
        %v195 = vshll.u32 %v186, %v193
        %v196 = vshrl.u32 %v178, %v194
        %v197 = vor.u32 %v195, %v196
        %v198 = vsub.s32 4294967266, %v193
        %v199 = vadd.s32 %v198, 127
        %v200 = vshll.u32 %v199, 23
        %v201 = vor.u32 4788187, %v200
        %v202 = vand.u32 2147483647, %v201
        %v204 = vcvt.s32.f32 %v197
        %v205 = vmul.f32 %v204, %v202
        %v206 = vxor.u32 %v205, 2147483648
        %v207 = vsel %vm124, %v206, %v205
        %v208 = vsub.s32 4, %v184
        %v209 = vsel %vm124, %v208, %v184
        %v210 = vsel %vm123, %v121, %v207
        %v211 = vsel %vm123, 0, %v209
        %v212 = vcosq.f32.pop %v210
        %v213 = vsinq.f32.pop %v210
        %vm214 = vweird.f32 %v121
        %v215 = vadd.s32 %v211, 3
        %v216 = vand.u32 %v215, 3
        %vm217 = vcmp.lt.s32.totalorder %v216, 2
        %vm218 = vcmp.eq.s32.totalorder %v216, 0
        %v219 = vxor.u32 %v213, 2147483648
        %v220 = vsel %vm218, %v212, %v219
        %vm221 = vcmp.eq.s32.totalorder %v216, 2
        %v222 = vxor.u32 %v212, 2147483648
        %v223 = vsel %vm221, %v222, %v213
        %v224 = vsel %vm217, %v220, %v223
        %v225 = vsel %vm214, nan, %v224
        %v226 = vand.u32 2147483647, %v121
        %vm227 = vcmp.le.f32.partialorder %v226, 0.7853982
        %vm228 = vcmp.lt.s32.totalorder %v121, 0
        %v229 = vand.u32 %v121, 2139095040
        %v230 = vshrl.u32 %v229, 23
        %v231 = vsub.s32 %v230, 127
        %v232 = vand.u32 2147483647, %v121
        %v233 = vand.u32 %v232, 8388607
        %v234 = vor.u32 %v233, 8388608
        %v235 = vsub.s32 0, %v234
        %v236 = vadd.s32 %v231, 1
        %vm237 = vcmp.gt.s32.totalorder %v236, 0
        %v238 = vsel %vm237, %v236, 0
        %v239 = vshrl.u32 %v238, 5
        %v240 = vand.u32 %v238, 31
        %v241 = vsub.s32 32, %v240
        %v242 = vshrl.u32 683565275, %v241
        %v243 = vshll.u32 683565275, %v240
        %v244 = vshrl.u32 2475754826, %v241
        %v245 = vor.u32 %v243, %v244
        %v246 = vshll.u32 2475754826, %v240
        %v247 = vshrl.u32 2131351028, %v241
        %v248 = vor.u32 %v246, %v247
        %v249 = vshll.u32 2131351028, %v240
        %v250 = vshrl.u32 2102212464, %v241
        %v251 = vor.u32 %v249, %v250
        %v252 = vshll.u32 2102212464, %v240
        %v253 = vshrl.u32 920167782, %v241
        %v254 = vor.u32 %v252, %v253
        %v255 = vshll.u32 920167782, %v240
        %v256 = vshrl.u32 1326507024, %v241
        %v257 = vor.u32 %v255, %v256
        %vm258 = vcmp.lt.s32.totalorder %v239, 1
        %vm259 = vcmp.lt.s32.totalorder %v239, 2
        %vm260 = vcmp.lt.s32.totalorder %v239, 3
        %vm261 = vcmp.lt.s32.totalorder %v239, 4
        %v262 = vsel %vm258, %v242, %v245
        %v263 = vsel %vm261, %v251, 2102212464
        %v264 = vsel %vm260, %v248, %v263
        %v265 = vsel %vm259, %v262, %v264
        %v266 = vsel %vm258, %v245, %v248
        %v267 = vsel %vm261, %v254, 920167782
        %v268 = vsel %vm260, %v251, %v267
        %v269 = vsel %vm259, %v266, %v268
        %v270 = vsel %vm258, %v248, %v251
        %v271 = vsel %vm261, %v257, 1326507024
        %v272 = vsel %vm260, %v254, %v271
        %v273 = vsel %vm259, %v270, %v272
        %v274 = vshll.u32 %v234, 8
        %v275 = vmul.u32.u64.compose %v274, %v273
        %v276 = vextract.low.u32 %v275
        %v277 = vextract.high.u32 %v275
        %v278 = vmul.u32.u64.compose %v274, %v269
        %v279 = vextract.low.u32 %v278
        %v280 = vextract.high.u32 %v278
        %v281 = vmul.u32 %v274, %v265
        %v282 = vadd.s32 %v277, %v279
        %vm283 = vc.u32 %v277, %v279
        %v284 = vadd.s32 %v280, 1
        %v285 = vsel %vm283, %v284, %v280
        %v286 = vadd.s32 %v281, %v285
        %v287 = vadd.s32 %v286, 536870912
        %v288 = vshrl.u32 %v287, 30
        %v289 = vshll.u32 %v288, 30
        %v290 = vsub.s32 %v286, %v289
        %vm291 = vcmp.lt.s32.totalorder %v290, 0
        %v292 = vsub.s32 0, %v290
        %v293 = vsel %vm291, %v292, %v290
        %v294 = vclz %v293
        %v295 = vsub.s32 %v294, 2
        %vm296 = vcmp.gt.s32.totalorder 0, %v295
        %v297 = vsel %vm296, 0, %v295
        %v298 = vsub.s32 32, %v297
        %v299 = vshll.u32 %v290, %v297
        %v300 = vshrl.u32 %v282, %v298
        %v301 = vor.u32 %v299, %v300
        %v302 = vsub.s32 4294967266, %v297
        %v303 = vadd.s32 %v302, 127
        %v304 = vshll.u32 %v303, 23
        %v305 = vor.u32 4788187, %v304
        %v306 = vand.u32 2147483647, %v305
        %v308 = vcvt.s32.f32 %v301
        %v309 = vmul.f32 %v308, %v306
        %v310 = vxor.u32 %v309, 2147483648
        %v311 = vsel %vm228, %v310, %v309
        %v312 = vsub.s32 4, %v288
        %v313 = vsel %vm228, %v312, %v288
        %v314 = vsel %vm227, %v121, %v311
        %v315 = vsel %vm227, 0, %v313
        %v316 = vcosq.f32.pop %v314
        %v317 = vsinq.f32.pop %v314
        %vm318 = vweird.f32 %v121
        %v319 = vand.u32 %v315, 3
        %vm320 = vcmp.lt.s32.totalorder %v319, 2
        %vm321 = vcmp.eq.s32.totalorder %v319, 0
        %v322 = vxor.u32 %v317, 2147483648
        %v323 = vsel %vm321, %v316, %v322
        %vm324 = vcmp.eq.s32.totalorder %v319, 2
        %v325 = vxor.u32 %v316, 2147483648
        %v326 = vsel %vm324, %v325, %v317
        %v327 = vsel %vm320, %v323, %v326
        %v328 = vsel %vm318, nan, %v327
        %330 = vrot.lane.b32.xlu0 %v328, 16
        %v331 = vpop.permute.xlu0 %330
        %vm333 = vcmask 130048
        %v334 = vsel %vm333, %v225, %v331
        %vm335 = vcmask 261120
        %336 = vst.msk [vmem:[%s107] sm:$0xff] %vm335, %v334
        %s337 = sand.u32 %s45, 1
        %s338 = scalar_lea.sflag [#allocation4], %s337
        %s339 = sand.u32 %s45, 1
        %s340 = smul.addr %s339, 8
        %s341 = scalar_lea.vmem [#allocation5], %s340
        // Predicated region
        $region29: #{tpu_custom_call.1} parent=23 // pred_check
          %p342 = pneg %p55
        $region30: #{tpu_custom_call.1} parent=23 // pred_check_branch
          %344 = sbr.rel (%p342) target = $region32
        $region31: #{tpu_custom_call.1} parent=23 // pred_region
          %s346 = ssub.s32 128, 128
          %347 = vsyncadd %s338, %s346
          %s348 = smul.addr %s16, 128
          %s349 = scalar_lea.hbm %s1, %s348
          %s351 = sshll.u32 %s341, 4
          %s352 = int_to_ptr.vmem [resolvable:$true] %s351
          %354 = dma.vmem_to_hbm [thread:$0]  %s352, 128, %s349, %s338
        $region32: #{tpu_custom_call.1} parent=23 // pred_fallthru
          _
      $region24: #{tpu_custom_call.1} parent=5 // pred_fallthru
        _
      %p355 = scmp.le.s32.totalorder 2, %s11
      // Predicated region
      $region33: #{tpu_custom_call.1} parent=5 // pred_check
        %p356 = pneg %p355
      $region34: #{tpu_custom_call.1} parent=5 // pred_check_branch
        %358 = sbr.rel (%p356) target = $region36
      $region35: #{tpu_custom_call.1} parent=5 // pred_region
        %s359 = ssub.s32 %s11, 2
        // Predicated region
        $region37: #{tpu_custom_call.1} parent=35 // pred_check
          %p360 = pneg %p61
        $region38: #{tpu_custom_call.1} parent=35 // pred_check_branch
          %362 = sbr.rel (%p360) target = $region40
        $region39: #{tpu_custom_call.1} parent=35 // pred_region
          %s363 = sand.u32 %s46, 1
          %s364 = scalar_lea.sflag [#allocation4], %s363
          %s365 = sand.u32 %s46, 1
          %s366 = smul.addr %s365, 8
          %s367 = scalar_lea.vmem [#allocation5], %s366
          %368 = dma.done %s364, 128
        $region40: #{tpu_custom_call.1} parent=35 // pred_fallthru
          _
      $region36: #{tpu_custom_call.1} parent=5 // pred_fallthru
        _
    $region6: #{tpu_custom_call.1} parent=1 // loop_footer
      %s15 = sadd.s32 1, %s11
    $region7: #{tpu_custom_call.1} parent=1 // loop_footer_branch
      %10 = sbr.rel target = $region3
    $region8: #{tpu_custom_call.1} parent=1 // loop_exit
      _
    %369 = vsyncpa [#allocation3], 1
    %s370 = scalar_lea.sflag [#allocation3], 1
    %371 = vsyncpa %s370, 1
    %372 = vsyncpa [#allocation4], 1
    %s373 = scalar_lea.sflag [#allocation4], 1
    %374 = vsyncpa %s373, 1

</llo_original>
